<compile_context>
chip_gen: v6e
topology: v6e:2x2x1
jax: 0.10.0
libtpu: 0.0.40
codegen_flags: <defaults>
</compile_context>

<pallas_src>
import functools

import jax
import jax.numpy as jnp
from jax.experimental import pallas as pl
from jax.experimental.pallas import tpu as pltpu


# --------------------------------------------------------------------- Pallas kernel

def _ln_feats_kernel(x_ref, g_ref, b_ref, o_ref, *, eps):
    # x_ref: (r_tile, F, t_tile) in the input dtype.  Normalize over axis=1 (the
    # sublane / n_feats axis); time stays lane-dense.  g_ref / b_ref: (1, F, 1) f32.
    x = x_ref[...].astype(jnp.float32)
    inv_f = 1.0 / x.shape[1]
    mu = jnp.sum(x, axis=1, keepdims=True) * inv_f
    ex2 = jnp.sum(x * x, axis=1, keepdims=True) * inv_f
    var = jnp.maximum(ex2 - mu * mu, 0.0)           # guard tiny negative drift
    rstd = jax.lax.rsqrt(var + eps)
    y = (x - mu) * rstd * g_ref[...] + b_ref[...]
    o_ref[...] = y.astype(o_ref.dtype)


# ------------------------------------------------------------------------- wrapper

def cnn_layer_norm(x, gamma, beta, eps=1e-5):
    """CNNLayerNorm forward: LayerNorm over dim 2 (n_feats) of x:(B, C, F, T).

    Numerically equivalent to the PyTorch module's
        x.transpose(2,3) -> nn.LayerNorm(F) -> transpose(2,3)
    but with no transposes: the reduction runs over the sublane (F) axis while the
    time axis stays lane-dense.  Output dtype matches the input dtype.
    """
    B, C, F, T = x.shape
    R = B * C
    xr = x.reshape(R, F, T)
    itemsize = jnp.dtype(x.dtype).itemsize

    # Per-block byte budget (native dtype).  With double-buffered in + out blocks plus
    # the in-kernel f32 temporaries this stays comfortably inside the 48 MiB scoped
    # VMEM limit set below on every generation (v5e/v6e/v7x).
    block_budget = 4 * 1024 * 1024

    if F * T * itemsize <= block_budget:
        # Full-T row slabs: each block is one contiguous HBM run.
        t_tile = T
        r_tile = max(1, block_budget // (F * T * itemsize))
    else:
        # Row slab too big: take one row and split time in lane-dense 128 multiples.
        r_tile = 1
        t_tile = min(T, max(1, block_budget // (F * 128 * itemsize)) * 128)

    r_tile = min(r_tile, R)
    # Keep >= 2 grid steps on the parallel row axis so both v7x TensorCores get work.
    if R >= 2:
        r_tile = min(r_tile, pl.cdiv(R, 2))

    grid = (pl.cdiv(R, r_tile), pl.cdiv(T, t_tile))

    out = pl.pallas_call(
        functools.partial(_ln_feats_kernel, eps=eps),
        out_shape=jax.ShapeDtypeStruct((R, F, T), x.dtype),
        grid=grid,
        in_specs=[
            pl.BlockSpec((r_tile, F, t_tile), lambda i, j: (i, 0, j)),
            pl.BlockSpec((1, F, 1), lambda i, j: (0, 0, 0)),   # gamma (resident)
            pl.BlockSpec((1, F, 1), lambda i, j: (0, 0, 0)),   # beta  (resident)
        ],
        out_specs=pl.BlockSpec((r_tile, F, t_tile), lambda i, j: (i, 0, j)),
        compiler_params=pltpu.CompilerParams(
            dimension_semantics=("parallel", "parallel"),
            vmem_limit_bytes=48 * 1024 * 1024,
        ),
    )(
        xr,
        gamma.astype(jnp.float32).reshape(1, F, 1),
        beta.astype(jnp.float32).reshape(1, F, 1),
    )
    return out.reshape(B, C, F, T)


# ---------------------------------------------------------------- pure-JAX reference

def _reference(x, gamma, beta, eps=1e-5):
    xt = jnp.swapaxes(x.astype(jnp.float32), 2, 3)    # (B, C, T, F)
    mu = jnp.mean(xt, axis=-1, keepdims=True)
    var = jnp.mean((xt - mu) ** 2, axis=-1, keepdims=True)
    g = gamma.astype(jnp.float32)
    b = beta.astype(jnp.float32)
    y = (xt - mu) * jax.lax.rsqrt(var + eps) * g + b
    return jnp.swapaxes(y, 2, 3)                      # back to (B, C, F, T)


# ------------------------------------------------------------------------------ main

if __name__ == "__main__":
    B, C, F, T = 2, 4, 16, 16     # (batch, channels, n_feats, time)

    key = jax.random.PRNGKey(0)
    kx, kg, kb = jax.random.split(key, 3)
    x = jax.random.normal(kx, (B, C, F, T), dtype=jnp.float32)
    gamma = 1.0 + 0.1 * jax.random.normal(kg, (F,), dtype=jnp.float32)
    beta = 0.1 * jax.random.normal(kb, (F,), dtype=jnp.float32)

    fwd = jax.jit(cnn_layer_norm)

    # f32 path
    out = fwd(x, gamma, beta)
    jax.block_until_ready(out)
    ref = _reference(x, gamma, beta)
    assert out.shape == (B, C, F, T), out.shape
    assert out.dtype == x.dtype, out.dtype
    max_err = float(jnp.max(jnp.abs(out.astype(jnp.float32) - ref)))
    assert max_err < 1e-4, f"f32 max abs error {max_err}"

    # bf16 path (input dtype preserved end-to-end, no wrapper-side cast pass)
    x_bf16 = x.astype(jnp.bfloat16)
    out_bf16 = fwd(x_bf16, gamma, beta)
    jax.block_until_ready(out_bf16)
    ref_bf16 = _reference(x_bf16, gamma, beta)
    assert out_bf16.dtype == jnp.bfloat16, out_bf16.dtype
    max_err_bf16 = float(jnp.max(jnp.abs(out_bf16.astype(jnp.float32) - ref_bf16)))
    assert max_err_bf16 < 5e-2, f"bf16 max abs error {max_err_bf16}"

    print("KERNEL_OK")
</pallas_src>

<mosaic_0001>
module attributes {stable_mosaic.version = 11 : i64} {
  func.func @_ln_feats_kernel(%arg0: i32, %arg1: i32, %arg2: memref<4x16x16xf32, #tpu.memory_space<vmem>>, %arg3: memref<1x16x1xf32, #tpu.memory_space<vmem>>, %arg4: memref<1x16x1xf32, #tpu.memory_space<vmem>>, %arg5: memref<4x16x16xf32, #tpu.memory_space<vmem>>) attributes {dimension_semantics = [#tpu.dimension_semantics<parallel>, #tpu.dimension_semantics<parallel>], iteration_bounds = array<i64: 2, 1>, scalar_prefetch = 0 : i64, scratch_operands = 0 : i64, tpu.core_type = #tpu.core_type<tc>, window_params = [{transform_indices = @transform_0, window_bounds = array<i64: 4, 16, 16>}, {pipeline_mode = #tpu.pipeline_mode<synchronous>, transform_indices = @transform_1, window_bounds = array<i64: 1, 16, 1>}, {pipeline_mode = #tpu.pipeline_mode<synchronous>, transform_indices = @transform_2, window_bounds = array<i64: 1, 16, 1>}, {transform_indices = @transform_3, window_bounds = array<i64: 4, 16, 16>}]} {
    %c0 = arith.constant 0 : index
    %c0_0 = arith.constant 0 : index
    %c0_1 = arith.constant 0 : index
    %0 = vector.load %arg2[%c0, %c0_0, %c0_1] : memref<4x16x16xf32, #tpu.memory_space<vmem>>, vector<4x16x16xf32>
    %cst = arith.constant dense<0.000000e+00> : vector<4x16xf32>
    %1 = vector.multi_reduction <add>, %0, %cst [1] : vector<4x16x16xf32> to vector<4x16xf32>
    %2 = vector.shape_cast %1 : vector<4x16xf32> to vector<4x1x16xf32>
    %cst_2 = arith.constant 6.250000e-02 : f32
    %3 = vector.broadcast %cst_2 : f32 to vector<4x1x16xf32>
    %4 = arith.mulf %2, %3 : vector<4x1x16xf32>
    %5 = arith.mulf %0, %0 : vector<4x16x16xf32>
    %cst_3 = arith.constant dense<0.000000e+00> : vector<4x16xf32>
    %6 = vector.multi_reduction <add>, %5, %cst_3 [1] : vector<4x16x16xf32> to vector<4x16xf32>
    %7 = vector.shape_cast %6 : vector<4x16xf32> to vector<4x1x16xf32>
    %cst_4 = arith.constant 6.250000e-02 : f32
    %8 = vector.broadcast %cst_4 : f32 to vector<4x1x16xf32>
    %9 = arith.mulf %7, %8 : vector<4x1x16xf32>
    %10 = arith.mulf %4, %4 : vector<4x1x16xf32>
    %11 = arith.subf %9, %10 : vector<4x1x16xf32>
    %cst_5 = arith.constant 0.000000e+00 : f32
    %12 = vector.broadcast %cst_5 : f32 to vector<4x1x16xf32>
    %13 = arith.maximumf %11, %12 : vector<4x1x16xf32>
    %cst_6 = arith.constant 9.99999974E-6 : f32
    %14 = vector.broadcast %cst_6 : f32 to vector<4x1x16xf32>
    %15 = arith.addf %13, %14 : vector<4x1x16xf32>
    %16 = math.rsqrt %15 : vector<4x1x16xf32>
    %17 = vector.broadcast %4 : vector<4x1x16xf32> to vector<4x16x16xf32>
    %18 = arith.subf %0, %17 : vector<4x16x16xf32>
    %19 = vector.broadcast %16 : vector<4x1x16xf32> to vector<4x16x16xf32>
    %20 = arith.mulf %18, %19 : vector<4x16x16xf32>
    %c0_7 = arith.constant 0 : index
    %c0_8 = arith.constant 0 : index
    %c0_9 = arith.constant 0 : index
    %21 = vector.load %arg3[%c0_7, %c0_8, %c0_9] : memref<1x16x1xf32, #tpu.memory_space<vmem>>, vector<1x16x1xf32>
    %22 = vector.broadcast %21 : vector<1x16x1xf32> to vector<4x16x16xf32>
    %23 = arith.mulf %20, %22 : vector<4x16x16xf32>
    %c0_10 = arith.constant 0 : index
    %c0_11 = arith.constant 0 : index
    %c0_12 = arith.constant 0 : index
    %24 = vector.load %arg4[%c0_10, %c0_11, %c0_12] : memref<1x16x1xf32, #tpu.memory_space<vmem>>, vector<1x16x1xf32>
    %25 = vector.broadcast %24 : vector<1x16x1xf32> to vector<4x16x16xf32>
    %26 = arith.addf %23, %25 : vector<4x16x16xf32>
    %c0_13 = arith.constant 0 : index
    %c0_14 = arith.constant 0 : index
    %c0_15 = arith.constant 0 : index
    %27 = vector.load %arg5[%c0_13, %c0_14, %c0_15] : memref<4x16x16xf32, #tpu.memory_space<vmem>>, vector<4x16x16xf32>
    tpu.vector_store %arg5[%c0_13, %c0_14, %c0_15], %26 {strides = array<i32>} : memref<4x16x16xf32, #tpu.memory_space<vmem>>, vector<4x16x16xf32>,
    return
  }
  func.func @transform_0(%arg0: i32, %arg1: i32) -> (i32, i32, i32) {
    %c0_i32 = arith.constant 0 : i32
    %c0_i32_0 = arith.constant 0 : i32
    return %arg0, %c0_i32, %arg1 : i32, i32, i32
  }
  func.func @transform_1(%arg0: i32, %arg1: i32) -> (i32, i32, i32) {
    %c0_i32 = arith.constant 0 : i32
    %c0_i32_0 = arith.constant 0 : i32
    %c0_i32_1 = arith.constant 0 : i32
    %c0_i32_2 = arith.constant 0 : i32
    return %c0_i32, %c0_i32_0, %c0_i32_1 : i32, i32, i32
  }
  func.func @transform_2(%arg0: i32, %arg1: i32) -> (i32, i32, i32) {
    %c0_i32 = arith.constant 0 : i32
    %c0_i32_0 = arith.constant 0 : i32
    %c0_i32_1 = arith.constant 0 : i32
    %c0_i32_2 = arith.constant 0 : i32
    return %c0_i32, %c0_i32_0, %c0_i32_1 : i32, i32, i32
  }
  func.func @transform_3(%arg0: i32, %arg1: i32) -> (i32, i32, i32) {
    %c0_i32 = arith.constant 0 : i32
    %c0_i32_0 = arith.constant 0 : i32
    return %arg0, %c0_i32, %arg1 : i32, i32, i32
  }
}

</mosaic_0001>

<llo_original>
// kernel: cnn_layer_norm.1
$region0: #{cnn_layer_norm.1}
  #allocation0 [shape = 'u32[]', space=smem, size = 0x4, offset = 0x4, fixed_abs, tag = 'smem constant byte address 0x4 - core index']
  #allocation1 [shape = 'u32[144,128]{1,0:T(1,128)}', space=vmem, size = 0x12000, scoped, tag = 'internal scratch']
  %s0 = inlined_call_operand.hbm [shape: f32[8,16,16], index: 0, kind: input, shape index: {}]
  %s1 = inlined_call_operand.vmem [shape: f32[1,16,1], index: 1, kind: input, shape index: {}]
  %s2 = inlined_call_operand.vmem [shape: f32[1,16,1], index: 2, kind: input, shape index: {}]
  %s3 = inlined_call_operand.hbm [shape: f32[8,16,16], index: 3, kind: output, shape index: {}]
  %s4 = sld [smem:[#allocation0]]
  $region49: #{cnn_layer_norm.1} parent=0
    _
  %s6 = ssub.s32 1, %s4
  %s7 = scalar_select 0, %s6, %s4
  $region1: #{cnn_layer_norm.1} parent=0
    #allocation2 [shape = 'u8[65536]{0}', space=vmem, size = 0x10000, scoped, tag = 'input window, operand 0']
    #allocation3 [shape = 's32[2]{0}', space=sflag, size = 0x8, scoped, tag = 'scoped memory for cnn_layer_norm.1']
    #allocation4 [shape = 's32[2]{0}', space=sflag, size = 0x8, scoped, tag = 'scoped memory for cnn_layer_norm.1']
    #allocation5 [shape = 'u8[65536]{0}', space=vmem, size = 0x10000, scoped, tag = 'output window, operand 0']
    %8 = vsyncpa [#allocation3], 0
    %s9 = scalar_lea.sflag [#allocation3], 1
    %10 = vsyncpa %s9, 0
    %11 = vsyncpa [#allocation4], 0
    %s12 = scalar_lea.sflag [#allocation4], 1
    %13 = vsyncpa %s12, 0
    loop: start=0, step=1, limit=4
    $region2: #{cnn_layer_norm.1} parent=1 // loop_pre_header
      _
    $region3: #{cnn_layer_norm.1} parent=1 // loop_header
      %s15 = sphi 0, %s19
      %p16 = scmp.ge.s32.totalorder %s15, 4
      %s22 = sphi 0, %s34
      %s23 = sphi 0, %s30
      %s24 = sphi 0, %s22
      %s25 = sphi 0, %s23
      %s26 = sphi 0, %s24
      %s27 = sphi 0, %s25
      %s39 = sphi 0, %s41
      %s42 = sphi 0, %s39
      %s43 = sphi 0, %s42
      %s59 = sphi 0, %s43
      %s63 = sphi 0, %s63
      %s65 = sphi 0, %s63
      %s66 = sphi 0, %s65
      %s80 = sphi 0, %s66
      %s84 = sphi 0, %s84
      %s86 = sphi 0, %s84
      %s87 = sphi 0, %s86
      %s101 = sphi 0, %s87
      %s109 = sphi 0, %s111
      %s112 = sphi 0, %s109
      %s113 = sphi 0, %s112
      %s129 = sphi 0, %s113
    $region4: #{cnn_layer_norm.1} parent=1 // loop_header_branch
      %18 = sbr.rel (%p16) target = $region8
    $region5: #{cnn_layer_norm.1} parent=1 // loop_body
      %s20 = ssub.s32 %s15, 1
      %s21 = ssub.s32 %s15, 2
      %s28 = sadd.s32 1, %s23
      %p29 = scmp.ge.s32.totalorder %s28, 1
      %s30 = scalar_select %p29, 0, %s28
      %s31 = sadd.s32 1, %s22
      %s32 = scalar_select %p29, %s31, %s22
      %p33 = scmp.ge.s32.totalorder %s32, 2
      %s34 = scalar_select %p33, 0, %s32
      %s35 = ssub.s32 %s22, %s34
      %s36 = ssub.s32 %s23, %s30
      %s37 = sor.u32 %s35, %s36
      %p38 = scmp.eq.s32.totalorder %s37, 0
      %s40 = sadd.s32 %s39, 1
      %s41 = scalar_select %p38, %s39, %s40
      %p44 = pneg %p38
      %p45 = scmp.eq.s32.totalorder %s15, 1
      %p46 = por %p44, %p45
      %p47 = scmp.ne.s32.totalorder %s39, %s42
      %p48 = scmp.eq.s32.totalorder %s15, 0
      %p49 = por %p47, %p48
      %p50 = scmp.ne.s32.totalorder %s39, %s42
      %p51 = scmp.eq.s32.totalorder %s20, 1
      %p52 = por %p50, %p51
      %p53 = scmp.ne.s32.totalorder %s42, %s43
      %p54 = scmp.eq.s32.totalorder %s20, 0
      %p55 = por %p53, %p54
      %p56 = scmp.ne.s32.totalorder %s42, %s43
      %p57 = scmp.eq.s32.totalorder %s21, 1
      %p58 = por %p56, %p57
      %p60 = scmp.ne.s32.totalorder %s43, %s59
      %p61 = scmp.eq.s32.totalorder %s21, 0
      %p62 = por %p60, %p61
      %s64 = sadd.s32 %s63, 1
      %p67 = scmp.eq.s32.totalorder %s15, 1
      %p68 = scmp.ne.s32.totalorder %s63, %s65
      %p69 = scmp.eq.s32.totalorder %s15, 0
      %p70 = por %p68, %p69
      %p71 = scmp.ne.s32.totalorder %s63, %s65
      %p72 = scmp.eq.s32.totalorder %s20, 1
      %p73 = por %p71, %p72
      %p74 = scmp.ne.s32.totalorder %s65, %s66
      %p75 = scmp.eq.s32.totalorder %s20, 0
      %p76 = por %p74, %p75
      %p77 = scmp.ne.s32.totalorder %s65, %s66
      %p78 = scmp.eq.s32.totalorder %s21, 1
      %p79 = por %p77, %p78
      %p81 = scmp.ne.s32.totalorder %s66, %s80
      %p82 = scmp.eq.s32.totalorder %s21, 0
      %p83 = por %p81, %p82
      %s85 = sadd.s32 %s84, 1
      %p88 = scmp.eq.s32.totalorder %s15, 1
      %p89 = scmp.ne.s32.totalorder %s84, %s86
      %p90 = scmp.eq.s32.totalorder %s15, 0
      %p91 = por %p89, %p90
      %p92 = scmp.ne.s32.totalorder %s84, %s86
      %p93 = scmp.eq.s32.totalorder %s20, 1
      %p94 = por %p92, %p93
      %p95 = scmp.ne.s32.totalorder %s86, %s87
      %p96 = scmp.eq.s32.totalorder %s20, 0
      %p97 = por %p95, %p96
      %p98 = scmp.ne.s32.totalorder %s86, %s87
      %p99 = scmp.eq.s32.totalorder %s21, 1
      %p100 = por %p98, %p99
      %p102 = scmp.ne.s32.totalorder %s87, %s101
      %p103 = scmp.eq.s32.totalorder %s21, 0
      %p104 = por %p102, %p103
      %s105 = ssub.s32 %s22, %s34
      %s106 = ssub.s32 %s23, %s30
      %s107 = sor.u32 %s105, %s106
      %p108 = scmp.eq.s32.totalorder %s107, 0
      %s110 = sadd.s32 %s109, 1
      %s111 = scalar_select %p108, %s109, %s110
      %p114 = pneg %p108
      %p115 = scmp.eq.s32.totalorder %s15, 1
      %p116 = por %p114, %p115
      %p117 = scmp.ne.s32.totalorder %s109, %s112
      %p118 = scmp.eq.s32.totalorder %s15, 0
      %p119 = por %p117, %p118
      %p120 = scmp.ne.s32.totalorder %s109, %s112
      %p121 = scmp.eq.s32.totalorder %s20, 1
      %p122 = por %p120, %p121
      %p123 = scmp.ne.s32.totalorder %s112, %s113
      %p124 = scmp.eq.s32.totalorder %s20, 0
      %p125 = por %p123, %p124
      %p126 = scmp.ne.s32.totalorder %s112, %s113
      %p127 = scmp.eq.s32.totalorder %s21, 1
      %p128 = por %p126, %p127
      %p130 = scmp.ne.s32.totalorder %s113, %s129
      %p131 = scmp.eq.s32.totalorder %s21, 0
      %p132 = por %p130, %p131
      %p133 = scmp.le.s32.totalorder 1, %s15
      %p134 = scmp.lt.s32.totalorder %s15, 3
      %p135 = pnand %p133, %p134
      %p136 = pneg %p135
      // Predicated region
      $region9: #{cnn_layer_norm.1} parent=5 // pred_check
        _
      $region10: #{cnn_layer_norm.1} parent=5 // pred_check_branch
        %138 = sbr.rel (%p135) target = $region12
      $region11: #{cnn_layer_norm.1} parent=5 // pred_region
        %s139 = ssub.s32 %s15, 1
        // Predicated region
        $region13: #{cnn_layer_norm.1} parent=11 // pred_check
          %p140 = pneg %p76
        $region14: #{cnn_layer_norm.1} parent=11 // pred_check_branch
          %142 = sbr.rel (%p140) target = $region16
        $region15: #{cnn_layer_norm.1} parent=11 // pred_region
          _
        $region16: #{cnn_layer_norm.1} parent=11 // pred_fallthru
          _
        // Predicated region
        $region17: #{cnn_layer_norm.1} parent=11 // pred_check
          %p143 = pneg %p97
        $region18: #{cnn_layer_norm.1} parent=11 // pred_check_branch
          %145 = sbr.rel (%p143) target = $region20
        $region19: #{cnn_layer_norm.1} parent=11 // pred_region
          _
        $region20: #{cnn_layer_norm.1} parent=11 // pred_fallthru
          _
      $region12: #{cnn_layer_norm.1} parent=5 // pred_fallthru
        _
      %p146 = scmp.lt.s32.totalorder %s15, 2
      // Predicated region
      $region21: #{cnn_layer_norm.1} parent=5 // pred_check
        %p147 = pneg %p146
      $region22: #{cnn_layer_norm.1} parent=5 // pred_check_branch
        %149 = sbr.rel (%p147) target = $region24
      $region23: #{cnn_layer_norm.1} parent=5 // pred_region
        // Predicated region
        $region25: #{cnn_layer_norm.1} parent=23 // pred_check
          %p150 = pneg %p49
        $region26: #{cnn_layer_norm.1} parent=23 // pred_check_branch
          %152 = sbr.rel (%p150) target = $region28
        $region27: #{cnn_layer_norm.1} parent=23 // pred_region
          %s153 = sand.u32 %s39, 1
          %s154 = scalar_lea.sflag [#allocation3], %s153
          %s155 = sand.u32 %s39, 1
          %s156 = smul.addr %s155, 64
          %s157 = scalar_lea.vmem [#allocation2], %s156
          %s158 = smul.u32 4, %s22
          %s160 = ssub.s32 1024, 1024
          %161 = vsyncadd %s154, %s160
          %s162 = smul.addr %s158, 2
          %s163 = sadd.s32 %s23, %s162
          %s164 = smul.addr %s163, 128
          %s165 = scalar_lea.hbm %s0, %s164
          %s166 = sshll.u32 %s157, 4
          %s167 = int_to_ptr.vmem [resolvable:$true] %s166
          %172 = dma.hbm_to_vmem [thread:$0]  %s165, 1024, %s167, %s154, 128, 128, 8
        $region28: #{cnn_layer_norm.1} parent=23 // pred_fallthru
          _
      $region24: #{cnn_layer_norm.1} parent=5 // pred_fallthru
        _
      %p173 = scmp.le.s32.totalorder 1, %s15
      %p174 = scmp.lt.s32.totalorder %s15, 3
      %p175 = pnand %p173, %p174
      %p176 = pneg %p175
      // Predicated region
      $region29: #{cnn_layer_norm.1} parent=5 // pred_check
        _
      $region30: #{cnn_layer_norm.1} parent=5 // pred_check_branch
        %178 = sbr.rel (%p175) target = $region32
      $region31: #{cnn_layer_norm.1} parent=5 // pred_region
        %s179 = ssub.s32 %s15, 1
        %s180 = sand.u32 %s42, 1
        %s181 = scalar_lea.sflag [#allocation3], %s180
        %s182 = sand.u32 %s42, 1
        %s183 = smul.addr %s182, 64
        %s184 = scalar_lea.vmem [#allocation2], %s183
        // Predicated region
        $region33: #{cnn_layer_norm.1} parent=31 // pred_check
          %p185 = pneg %p55
        $region34: #{cnn_layer_norm.1} parent=31 // pred_check_branch
          %187 = sbr.rel (%p185) target = $region36
        $region35: #{cnn_layer_norm.1} parent=31 // pred_region
          %188 = dma.done %s181, 1024
        $region36: #{cnn_layer_norm.1} parent=31 // pred_fallthru
          _
        %s189 = sand.u32 %s42, 1
        %s190 = scalar_lea.sflag [#allocation3], %s189
        %s191 = sand.u32 %s42, 1
        %s192 = smul.addr %s191, 64
        %s193 = scalar_lea.vmem [#allocation2], %s192
        %p194 = pneg %p55
        %p195 = pneg %p52
        %p196 = pneg %p76
        %p197 = pneg %p73
        %p198 = pneg %p97
        %p199 = pneg %p94
        %p200 = pneg %p125
        %p201 = pneg %p122
        %s202 = sand.u32 %s112, 1
        %s203 = scalar_lea.sflag [#allocation4], %s202
        %s204 = sand.u32 %s112, 1
        %s205 = smul.addr %s204, 64
        %s206 = scalar_lea.vmem [#allocation5], %s205
        %s207 = smul.u32 4, %s24
        %s208 = smul.u32 4, %s24
        %v209 = vld [vmem:[%s184] sm:$0xff]
        %v210 = vld [vmem:[%s184 + $0x8] sm:$0xff]
        %v211 = vld [vmem:[%s184 + $0x10] sm:$0xff]
        %v212 = vld [vmem:[%s184 + $0x18] sm:$0xff]
        %v213 = vld [vmem:[%s184 + $0x20] sm:$0xff]
        %v214 = vld [vmem:[%s184 + $0x28] sm:$0xff]
        %v215 = vld [vmem:[%s184 + $0x30] sm:$0xff]
        %v216 = vld [vmem:[%s184 + $0x38] sm:$0xff]
        %vm217 = vcmask 130048
        %v218 = vsel %vm217, %v209, 0.0
        %v219 = vsel %vm217, %v210, 0.0
        %v220 = vadd.f32 %v218, %v219
        %v221 = vrot.slane %v220, 4
        %v222 = vadd.f32 %v220, %v221
        %v223 = vrot.slane %v222, 2
        %v224 = vadd.f32 %v222, %v223
        %v225 = vrot.slane %v224, 1
        %v226 = vadd.f32 %v224, %v225
        %v227 = vsel %vm217, %v211, 0.0
        %v228 = vsel %vm217, %v212, 0.0
        %v229 = vadd.f32 %v227, %v228
        %v230 = vrot.slane %v229, 4
        %v231 = vadd.f32 %v229, %v230
        %v232 = vrot.slane %v231, 2
        %v233 = vadd.f32 %v231, %v232
        %v234 = vrot.slane %v233, 1
        %v235 = vadd.f32 %v233, %v234
        %v236 = vsel %vm217, %v213, 0.0
        %v237 = vsel %vm217, %v214, 0.0
        %v238 = vadd.f32 %v236, %v237
        %v239 = vrot.slane %v238, 4
        %v240 = vadd.f32 %v238, %v239
        %v241 = vrot.slane %v240, 2
        %v242 = vadd.f32 %v240, %v241
        %v243 = vrot.slane %v242, 1
        %v244 = vadd.f32 %v242, %v243
        %v245 = vsel %vm217, %v215, 0.0
        %v246 = vsel %vm217, %v216, 0.0
        %v247 = vadd.f32 %v245, %v246
        %v248 = vrot.slane %v247, 4
        %v249 = vadd.f32 %v247, %v248
        %v250 = vrot.slane %v249, 2
        %v251 = vadd.f32 %v249, %v250
        %v252 = vrot.slane %v251, 1
        %v253 = vadd.f32 %v251, %v252
        %v254 = vmul.f32 %v226, 0.0625
        %v255 = vmul.f32 %v235, 0.0625
        %v256 = vmul.f32 %v244, 0.0625
        %v257 = vmul.f32 %v253, 0.0625
        %v258 = vmul.f32 %v209, %v209
        %v259 = vmul.f32 %v210, %v210
        %v260 = vmul.f32 %v211, %v211
        %v261 = vmul.f32 %v212, %v212
        %v262 = vmul.f32 %v213, %v213
        %v263 = vmul.f32 %v214, %v214
        %v264 = vmul.f32 %v215, %v215
        %v265 = vmul.f32 %v216, %v216
        %v266 = vsel %vm217, %v258, 0.0
        %v267 = vsel %vm217, %v259, 0.0
        %v268 = vadd.f32 %v266, %v267
        %v269 = vrot.slane %v268, 4
        %v270 = vadd.f32 %v268, %v269
        %v271 = vrot.slane %v270, 2
        %v272 = vadd.f32 %v270, %v271
        %v273 = vrot.slane %v272, 1
        %v274 = vadd.f32 %v272, %v273
        %v275 = vsel %vm217, %v260, 0.0
        %v276 = vsel %vm217, %v261, 0.0
        %v277 = vadd.f32 %v275, %v276
        %v278 = vrot.slane %v277, 4
        %v279 = vadd.f32 %v277, %v278
        %v280 = vrot.slane %v279, 2
        %v281 = vadd.f32 %v279, %v280
        %v282 = vrot.slane %v281, 1
        %v283 = vadd.f32 %v281, %v282
        %v284 = vsel %vm217, %v262, 0.0
        %v285 = vsel %vm217, %v263, 0.0
        %v286 = vadd.f32 %v284, %v285
        %v287 = vrot.slane %v286, 4
        %v288 = vadd.f32 %v286, %v287
        %v289 = vrot.slane %v288, 2
        %v290 = vadd.f32 %v288, %v289
        %v291 = vrot.slane %v290, 1
        %v292 = vadd.f32 %v290, %v291
        %v293 = vsel %vm217, %v264, 0.0
        %v294 = vsel %vm217, %v265, 0.0
        %v295 = vadd.f32 %v293, %v294
        %v296 = vrot.slane %v295, 4
        %v297 = vadd.f32 %v295, %v296
        %v298 = vrot.slane %v297, 2
        %v299 = vadd.f32 %v297, %v298
        %v300 = vrot.slane %v299, 1
        %v301 = vadd.f32 %v299, %v300
        %v302 = vmul.f32 %v274, 0.0625
        %v303 = vmul.f32 %v283, 0.0625
        %v304 = vmul.f32 %v292, 0.0625
        %v305 = vmul.f32 %v301, 0.0625
        %v306 = vmul.f32 %v254, %v254
        %v307 = vmul.f32 %v255, %v255
        %v308 = vmul.f32 %v256, %v256
        %v309 = vmul.f32 %v257, %v257
        %v310 = vsub.f32 %v302, %v306
        %v311 = vsub.f32 %v303, %v307
        %v312 = vsub.f32 %v304, %v308
        %v313 = vsub.f32 %v305, %v309
        %v314 = vmax.f32 %v310, 0.0
        %v315 = vmax.f32 %v311, 0.0
        %v316 = vmax.f32 %v312, 0.0
        %v317 = vmax.f32 %v313, 0.0
        %v318 = vadd.f32 %v314, 1e-05
        %v319 = vadd.f32 %v315, 1e-05
        %v320 = vadd.f32 %v316, 1e-05
        %v321 = vadd.f32 %v317, 1e-05
        %v322 = vrsqrt.pop %v318
        %v323 = vrsqrt.pop %v319
        %v324 = vrsqrt.pop %v320
        %v325 = vrsqrt.pop %v321
        %v326 = vsub.f32 %v209, %v254
        %v327 = vsub.f32 %v210, %v254
        %v328 = vsub.f32 %v211, %v255
        %v329 = vsub.f32 %v212, %v255
        %v330 = vsub.f32 %v213, %v256
        %v331 = vsub.f32 %v214, %v256
        %v332 = vsub.f32 %v215, %v257
        %v333 = vsub.f32 %v216, %v257
        %v334 = vmul.f32 %v326, %v322
        %v335 = vmul.f32 %v327, %v322
        %v336 = vmul.f32 %v328, %v323
        %v337 = vmul.f32 %v329, %v323
        %v338 = vmul.f32 %v330, %v324
        %v339 = vmul.f32 %v331, %v324
        %v340 = vmul.f32 %v332, %v325
        %v341 = vmul.f32 %v333, %v325
        %v342 = vld [vmem:[%s1] sm:$0xff]
        %v343 = vld [vmem:[%s1 + $0x8] sm:$0xff]
        %345 = vset.pattern.permute.xlu0 0
        %346 = vperm.xlu0 %345, %v342
        %v347 = vpop.permute.xlu0 %346
        %350 = vset.pattern.permute.xlu0 0
        %351 = vperm.xlu0 %350, %v343
        %v352 = vpop.permute.xlu0 %351
        %v354 = vmul.f32 %v334, %v347
        %v355 = vmul.f32 %v335, %v352
        %v356 = vmul.f32 %v336, %v347
        %v357 = vmul.f32 %v337, %v352
        %v358 = vmul.f32 %v338, %v347
        %v359 = vmul.f32 %v339, %v352
        %v360 = vmul.f32 %v340, %v347
        %v361 = vmul.f32 %v341, %v352
        %v362 = vld [vmem:[%s2] sm:$0xff]
        %v363 = vld [vmem:[%s2 + $0x8] sm:$0xff]
        %365 = vset.pattern.permute.xlu0 0
        %366 = vperm.xlu0 %365, %v362
        %v367 = vpop.permute.xlu0 %366
        %370 = vset.pattern.permute.xlu0 0
        %371 = vperm.xlu0 %370, %v363
        %v372 = vpop.permute.xlu0 %371
        %v374 = vadd.f32 %v354, %v367
        %v375 = vadd.f32 %v355, %v372
        %v376 = vadd.f32 %v356, %v367
        %v377 = vadd.f32 %v357, %v372
        %v378 = vadd.f32 %v358, %v367
        %v379 = vadd.f32 %v359, %v372
        %v380 = vadd.f32 %v360, %v367
        %v381 = vadd.f32 %v361, %v372
        %382 = vst.msk [vmem:[%s206] sm:$0xff] %vm217, %v374
        %383 = vst.msk [vmem:[%s206 + $0x8] sm:$0xff] %vm217, %v375
        %384 = vst.msk [vmem:[%s206 + $0x10] sm:$0xff] %vm217, %v376
        %385 = vst.msk [vmem:[%s206 + $0x18] sm:$0xff] %vm217, %v377
        %386 = vst.msk [vmem:[%s206 + $0x20] sm:$0xff] %vm217, %v378
        %387 = vst.msk [vmem:[%s206 + $0x28] sm:$0xff] %vm217, %v379
        %388 = vst.msk [vmem:[%s206 + $0x30] sm:$0xff] %vm217, %v380
        %389 = vst.msk [vmem:[%s206 + $0x38] sm:$0xff] %vm217, %v381
        %s390 = sand.u32 %s112, 1
        %s391 = scalar_lea.sflag [#allocation4], %s390
        %s392 = sand.u32 %s112, 1
        %s393 = smul.addr %s392, 64
        %s394 = scalar_lea.vmem [#allocation5], %s393
        // Predicated region
        $region37: #{cnn_layer_norm.1} parent=31 // pred_check
          %p395 = pneg %p122
        $region38: #{cnn_layer_norm.1} parent=31 // pred_check_branch
          %397 = sbr.rel (%p395) target = $region40
        $region39: #{cnn_layer_norm.1} parent=31 // pred_region
          %s398 = smul.u32 4, %s24
          %s400 = ssub.s32 1024, 1024
          %401 = vsyncadd %s391, %s400
          %s402 = smul.addr %s398, 2
          %s403 = sadd.s32 %s25, %s402
          %s404 = smul.addr %s403, 128
          %s405 = scalar_lea.hbm %s3, %s404
          %s406 = sshll.u32 %s394, 4
          %s407 = int_to_ptr.vmem [resolvable:$true] %s406
          %412 = dma.vmem_to_hbm [thread:$0]  %s407, 1024, %s405, %s391, 128, 128, 8
        $region40: #{cnn_layer_norm.1} parent=31 // pred_fallthru
          _
      $region32: #{cnn_layer_norm.1} parent=5 // pred_fallthru
        _
      %p413 = scmp.le.s32.totalorder 2, %s15
      // Predicated region
      $region41: #{cnn_layer_norm.1} parent=5 // pred_check
        %p414 = pneg %p413
      $region42: #{cnn_layer_norm.1} parent=5 // pred_check_branch
        %416 = sbr.rel (%p414) target = $region44
      $region43: #{cnn_layer_norm.1} parent=5 // pred_region
        %s417 = ssub.s32 %s15, 2
        // Predicated region
        $region45: #{cnn_layer_norm.1} parent=43 // pred_check
          %p418 = pneg %p128
        $region46: #{cnn_layer_norm.1} parent=43 // pred_check_branch
          %420 = sbr.rel (%p418) target = $region48
        $region47: #{cnn_layer_norm.1} parent=43 // pred_region
          %s421 = sand.u32 %s113, 1
          %s422 = scalar_lea.sflag [#allocation4], %s421
          %s423 = sand.u32 %s113, 1
          %s424 = smul.addr %s423, 64
          %s425 = scalar_lea.vmem [#allocation5], %s424
          %426 = dma.done %s422, 1024
        $region48: #{cnn_layer_norm.1} parent=43 // pred_fallthru
          _
      $region44: #{cnn_layer_norm.1} parent=5 // pred_fallthru
        _
    $region6: #{cnn_layer_norm.1} parent=1 // loop_footer
      %s19 = sadd.s32 1, %s15
    $region7: #{cnn_layer_norm.1} parent=1 // loop_footer_branch
      %14 = sbr.rel target = $region3
    $region8: #{cnn_layer_norm.1} parent=1 // loop_exit
      _
    %427 = vsyncpa [#allocation3], 1
    %s428 = scalar_lea.sflag [#allocation3], 1
    %429 = vsyncpa %s428, 1
    %430 = vsyncpa [#allocation4], 1
    %s431 = scalar_lea.sflag [#allocation4], 1
    %432 = vsyncpa %s431, 1

</llo_original>
